<compile_context>
chip_gen: v7x
topology: tpu7x:2x2x1
jax: 0.10.0
libtpu: 0.0.40
codegen_flags: <defaults>
</compile_context>

<pallas_src>
import functools

import jax
import jax.numpy as jnp
from jax.experimental import pallas as pl
from jax.experimental.pallas import tpu as pltpu


_SUPPORTED = ("relu", "leakyrelu", "prelu", "none", "silu", "gelu")
# ~1 MiB of f32 per block per array -> with in+out double-buffering this stays
# well under the smallest scoped-VMEM default (v5e: 16 MiB).
_TARGET_BLOCK_ELEMS = 1 << 18  # 262144 elements


def _unary_act_kernel(x_ref, o_ref, *, relu_type: str):
    """Elementwise activation with the slope / form baked in statically."""
    x = x_ref[...]
    if relu_type == "relu":
        o_ref[...] = jnp.maximum(x, jnp.zeros((), x.dtype))
    elif relu_type == "leakyrelu":
        o_ref[...] = jnp.where(x >= 0, x, x * jnp.asarray(0.2, x.dtype))
    elif relu_type == "silu":
        xf = x.astype(jnp.float32)
        # Numerically stable sigmoid via tanh (EUP): sigmoid(x)=0.5*(1+tanh(x/2)).
        sig = 0.5 * (jnp.tanh(0.5 * xf) + 1.0)
        o_ref[...] = (xf * sig).astype(o_ref.dtype)
    elif relu_type == "gelu":
        # PyTorch nn.GELU() default: exact erf form.
        xf = x.astype(jnp.float32)
        inv_sqrt2 = 0.7071067811865476
        o_ref[...] = (0.5 * xf * (1.0 + jax.lax.erf(xf * inv_sqrt2))).astype(o_ref.dtype)
    else:  # pragma: no cover - validated in the wrapper
        raise AssertionError(f"activation type {relu_type} not support.")


def _prelu_kernel(x_ref, a_ref, o_ref):
    x = x_ref[...]
    a = a_ref[...]                     # (tile_rows, 1) -> broadcast over lanes
    o_ref[...] = jnp.where(x >= 0, x, a * x)


def act_layer(x, relu_type: str = "leakyrelu", prelu_weight=None):
    """Pallas implementation of ActLayer.forward.

    x: (N, C, H, W) array.
    prelu_weight: (C,) slopes, only used for relu_type == 'prelu'
                  (defaults to PyTorch's PReLU init of 0.25).
    """
    relu_type = relu_type.lower()
    if relu_type not in _SUPPORTED:
        raise AssertionError(f"activation type {relu_type} not support.")

    if relu_type == "none":
        # Identity (PyTorch does x * 1.0); skip the HBM round trip entirely.
        return x

    n, c, h, w = x.shape
    dtype = x.dtype

    if relu_type == "prelu":
        if prelu_weight is None:
            prelu_weight = jnp.full((c,), 0.25, dtype)   # nn.PReLU default init
        rows, cols = n * c, h * w
        x2d = x.reshape(rows, cols)
        alpha = jnp.tile(prelu_weight.astype(dtype), (n,)).reshape(rows, 1)

        # Column tile: multiple of 128 (or the full col extent if small).
        tile_c = cols if cols <= 2048 else 2048
        target_r = max(8, (_TARGET_BLOCK_ELEMS // tile_c) // 8 * 8)
        tile_r = rows if rows <= target_r else target_r

        grid = (pl.cdiv(rows, tile_r), pl.cdiv(cols, tile_c))
        out2d = pl.pallas_call(
            _prelu_kernel,
            out_shape=jax.ShapeDtypeStruct((rows, cols), dtype),
            grid=grid,
            in_specs=[
                pl.BlockSpec((tile_r, tile_c), lambda i, j: (i, j)),
                pl.BlockSpec((tile_r, 1), lambda i, j: (i, 0)),   # tiny per-block slope slice
            ],
            out_specs=pl.BlockSpec((tile_r, tile_c), lambda i, j: (i, j)),
            compiler_params=pltpu.CompilerParams(
                dimension_semantics=("parallel", "parallel")),
        )(x2d, alpha)
        return out2d.reshape(n, c, h, w)

    # relu / leakyrelu / silu / gelu: purely elementwise -> flatten lane-dense.
    total = n * c * h * w
    lane = None
    for cand in (2048, 1024, 512, 256, 128):
        if total % cand == 0:
            lane = cand
            pad = 0
            break
    if lane is None:
        # Rare ragged case: pad the flat view up to a lane-dense multiple.
        lane = 1024
        pad = (-total) % lane

    flat = x.reshape(total)
    if pad:
        flat = jnp.pad(flat, (0, pad))
    rows = (total + pad) // lane
    x2d = flat.reshape(rows, lane)

    target_r = _TARGET_BLOCK_ELEMS // lane          # multiple of 8 by construction
    tile_r = rows if rows <= target_r else target_r

    kernel = functools.partial(_unary_act_kernel, relu_type=relu_type)
    out2d = pl.pallas_call(
        kernel,
        out_shape=jax.ShapeDtypeStruct((rows, lane), dtype),
        grid=(pl.cdiv(rows, tile_r),),
        in_specs=[pl.BlockSpec((tile_r, lane), lambda i: (i, 0))],
        out_specs=pl.BlockSpec((tile_r, lane), lambda i: (i, 0)),
        compiler_params=pltpu.CompilerParams(
            dimension_semantics=("parallel",)),
    )(x2d)

    out_flat = out2d.reshape(rows * lane)
    if pad:
        out_flat = out_flat[:total]
    return out_flat.reshape(n, c, h, w)


def _reference(x, relu_type, prelu_weight=None):
    relu_type = relu_type.lower()
    if relu_type == "relu":
        return jnp.maximum(x, 0.0)
    if relu_type == "leakyrelu":
        return jnp.where(x >= 0, x, 0.2 * x)
    if relu_type == "prelu":
        if prelu_weight is None:
            prelu_weight = jnp.full((x.shape[1],), 0.25, x.dtype)
        a = prelu_weight.reshape(1, -1, 1, 1)
        return jnp.where(x >= 0, x, a * x)
    if relu_type == "none":
        return x * 1.0
    if relu_type == "silu":
        return x * jax.nn.sigmoid(x)
    if relu_type == "gelu":
        return 0.5 * x * (1.0 + jax.lax.erf(x / jnp.sqrt(2.0)))
    raise AssertionError(relu_type)


if __name__ == "__main__":
    key = jax.random.PRNGKey(0)
    n, c, h, w = 2, 4, 16, 16
    x = jax.random.normal(key, (n, c, h, w), dtype=jnp.float32)

    # Deterministic PReLU weight (per-channel), nn.PReLU init value 0.25.
    prelu_w = jnp.full((c,), 0.25, jnp.float32)

    ok = True
    for rt in ["leakyrelu", "relu", "prelu", "none", "silu", "gelu"]:
        out = act_layer(x, rt, prelu_w if rt == "prelu" else None)
        out = jax.block_until_ready(out)
        ref = _reference(x, rt, prelu_w if rt == "prelu" else None)
        if not jnp.allclose(out, ref, atol=1e-5, rtol=1e-5):
            ok = False
            print(f"MISMATCH for {rt}")

    if ok:
        print("KERNEL_OK")
</pallas_src>

<mosaic_0001>
module attributes {stable_mosaic.version = 11 : i64} {
  func.func @_unary_act_kernel(%arg0: i32, %arg1: memref<1x2048xf32, #tpu.memory_space<vmem>>, %arg2: memref<1x2048xf32, #tpu.memory_space<vmem>>) attributes {dimension_semantics = [#tpu.dimension_semantics<parallel>], iteration_bounds = array<i64: 1>, scalar_prefetch = 0 : i64, scratch_operands = 0 : i64, tpu.core_type = #tpu.core_type<tc>, window_params = [{transform_indices = @transform_0, window_bounds = array<i64: 1, 2048>}, {transform_indices = @transform_1, window_bounds = array<i64: 1, 2048>}]} {
    %c0 = arith.constant 0 : index
    %c0_0 = arith.constant 0 : index
    %0 = vector.load %arg1[%c0, %c0_0] : memref<1x2048xf32, #tpu.memory_space<vmem>>, vector<1x2048xf32>
    %cst = arith.constant 0.000000e+00 : f32
    %1 = vector.broadcast %cst : f32 to vector<1x2048xf32>
    %2 = arith.cmpf oge, %0, %1 : vector<1x2048xf32>
    %cst_1 = arith.constant 2.000000e-01 : f32
    %3 = vector.broadcast %cst_1 : f32 to vector<1x2048xf32>
    %4 = arith.mulf %0, %3 : vector<1x2048xf32>
    %5 = arith.select %2, %0, %4 : vector<1x2048xi1>, vector<1x2048xf32>
    %c0_2 = arith.constant 0 : index
    %c0_3 = arith.constant 0 : index
    %6 = vector.load %arg2[%c0_2, %c0_3] : memref<1x2048xf32, #tpu.memory_space<vmem>>, vector<1x2048xf32>
    tpu.vector_store %arg2[%c0_2, %c0_3], %5 {strides = array<i32>} : memref<1x2048xf32, #tpu.memory_space<vmem>>, vector<1x2048xf32>,
    return
  }
  func.func @transform_0(%arg0: i32) -> (i32, i32) {
    %c0_i32 = arith.constant 0 : i32
    %c0_i32_0 = arith.constant 0 : i32
    return %arg0, %c0_i32 : i32, i32
  }
  func.func @transform_1(%arg0: i32) -> (i32, i32) {
    %c0_i32 = arith.constant 0 : i32
    %c0_i32_0 = arith.constant 0 : i32
    return %arg0, %c0_i32 : i32, i32
  }
}

</mosaic_0001>

<llo_original>
// kernel: tpu_custom_call.1
$region0: #{tpu_custom_call.1}
  #allocation0 [shape = 'u32[]', space=smem, size = 0x4, offset = 0x4, fixed_abs, tag = 'smem constant byte address 0x4 - core index']
  #allocation1 [shape = 'u32[144,128]{1,0:T(1,128)}', space=vmem, size = 0x12000, scoped, tag = 'internal scratch']
  %s0 = inlined_call_operand.hbm [shape: f32[1,2048], index: 0, kind: input, shape index: {}]
  %s1 = inlined_call_operand.hbm [shape: f32[1,2048], index: 1, kind: output, shape index: {}]
  %s2 = sld [smem:[#allocation0]]
  $region18: #{tpu_custom_call.1} parent=0
    _
  %s4 = ssub.s32 1, %s2
  %s5 = scalar_select 0, %s4, %s2
  $region1: #{tpu_custom_call.1} parent=0
    #allocation2 [shape = 'u8[8192]{0}', space=vmem, size = 0x2000, scoped, tag = 'input window, operand 0, single buffered']
    #allocation3 [shape = 's32[1]{0}', space=sflag, size = 0x4, scoped, tag = 'scoped memory for tpu_custom_call.1']
    #allocation4 [shape = 's32[1]{0}', space=sflag, size = 0x4, scoped, tag = 'scoped memory for tpu_custom_call.1']
    #allocation5 [shape = 'u8[8192]{0}', space=vmem, size = 0x2000, scoped, tag = 'output window, operand 0, single buffered']
    %6 = vsyncpa [#allocation3], 0
    %7 = vsyncpa [#allocation4], 0
    // Predicated region
    $region2: #{tpu_custom_call.1} parent=1 // pred_check
      _
    $region3: #{tpu_custom_call.1} parent=1 // pred_check_branch
      %9 = sbr.rel (0) target = $region5
    $region4: #{tpu_custom_call.1} parent=1 // pred_region
      %s11 = ssub.s32 256, 256
      %12 = vsyncadd [#allocation3], %s11
      %s14 = sshll.u32 [#allocation2], 4
      %s15 = int_to_ptr.vmem [resolvable:$true] %s14
      %17 = dma.hbm_to_vmem [thread:$0]  %s0, 256, %s15, [#allocation3]
    $region5: #{tpu_custom_call.1} parent=1 // pred_fallthru
      _
    // Predicated region
    $region6: #{tpu_custom_call.1} parent=1 // pred_check
      _
    $region7: #{tpu_custom_call.1} parent=1 // pred_check_branch
      %19 = sbr.rel (0) target = $region9
    $region8: #{tpu_custom_call.1} parent=1 // pred_region
      %20 = dma.done [#allocation3], 256
    $region9: #{tpu_custom_call.1} parent=1 // pred_fallthru
      _
    %v21 = vld [vmem:[#allocation2] sm:$0xff]
    %v22 = vld [vmem:[#allocation2 + $0x8] sm:$0xff]
    %vm23 = vcmp.ge.f32.partialorder %v21, 0.0
    %vm24 = vcmp.ge.f32.partialorder %v22, 0.0
    %v25 = vmul.f32 %v21, 0.2
    %v26 = vmul.f32 %v22, 0.2
    %v27 = vsel %vm23, %v21, %v25
    %v28 = vsel %vm24, %v22, %v26
    %29 = vst [vmem:[#allocation5] sm:$0xff] %v27
    %30 = vst [vmem:[#allocation5 + $0x8] sm:$0xff] %v28
    // Predicated region
    $region10: #{tpu_custom_call.1} parent=1 // pred_check
      _
    $region11: #{tpu_custom_call.1} parent=1 // pred_check_branch
      %32 = sbr.rel (0) target = $region13
    $region12: #{tpu_custom_call.1} parent=1 // pred_region
      %s34 = ssub.s32 256, 256
      %35 = vsyncadd [#allocation4], %s34
      %s37 = sshll.u32 [#allocation5], 4
      %s38 = int_to_ptr.vmem [resolvable:$true] %s37
      %40 = dma.vmem_to_hbm [thread:$0]  %s38, 256, %s1, [#allocation4]
    $region13: #{tpu_custom_call.1} parent=1 // pred_fallthru
      _
    // Predicated region
    $region14: #{tpu_custom_call.1} parent=1 // pred_check
      _
    $region15: #{tpu_custom_call.1} parent=1 // pred_check_branch
      %42 = sbr.rel (0) target = $region17
    $region16: #{tpu_custom_call.1} parent=1 // pred_region
      %43 = dma.done [#allocation4], 256
    $region17: #{tpu_custom_call.1} parent=1 // pred_fallthru
      _
    %44 = vsyncpa [#allocation3], 1
    %45 = vsyncpa [#allocation4], 1

</llo_original>
